<compile_context>
chip_gen: v7x
topology: tpu7x:2x2x1
jax: 0.10.0
libtpu: 0.0.40
codegen_flags: <defaults>
</compile_context>

<pallas_src>
import jax
import jax.numpy as jnp
from jax.experimental import pallas as pl
from jax.experimental.pallas import tpu as pltpu

_LANE = 128
_MIN_GRID_STEPS = 8            # enough steps to shard across 2 TCs + fill the pipeline
_MIN_TILE_BYTES = 128 * 1024   # don't shrink tiles below this chasing grid size


def _transpose_kernel(x_ref, o_ref):
    # x_ref: (tT, tD) VMEM tile; o_ref: (tD, tT) VMEM tile.
    # Swapping the two axes lowers to an XLU transpose (vector-extended slot),
    # so the kernel is purely HBM-bandwidth-bound.
    o_ref[...] = x_ref[...].T


def _vmem_budgets():
    """Generation-aware (tile_budget_bytes, vmem_limit_bytes)."""
    try:
        cap = pltpu.get_tpu_info().vmem_capacity_bytes
    except Exception:
        cap = 64 << 20  # conservative (v7x-class) default if the query is unavailable
    if cap >= (100 << 20):       # v5e / v6e: 128 MiB physical VMEM
        return 32 << 20, 64 << 20
    else:                        # v7x: 64 MiB physical VMEM per TensorCore
        return 24 << 20, 48 << 20


def _divisors_128(n):
    # Divisors of n that are multiples of 128, descending. n is a multiple of 128.
    return [d for d in range(n, _LANE - 1, -_LANE) if n % d == 0]


def _choose_tiles(B, T, D, itemsize, tile_budget):
    t_divs = _divisors_128(T)
    d_divs = _divisors_128(D)

    def footprint(tT, tD):        # 2 buffers x (input tile + output tile)
        return 4 * tT * tD * itemsize

    # For each tD (descending, starting with full D), the largest feasible tT.
    candidates = []
    for tD in d_divs:
        for tT in t_divs:
            if footprint(tT, tD) <= tile_budget:
                candidates.append((tT, tD))
                break
    if not candidates:
        candidates = [(t_divs[-1], d_divs[-1])]   # 128x128 always fits real budgets

    # Biggest / most balanced tile; ties prefer full-D (contiguous input reads,
    # feature grid axis drops to extent 1).
    tT, tD = max(candidates, key=lambda c: (min(c), c[0] * c[1], c[1]))

    # Megacore / pipeline: ensure enough grid steps (shrink tT first, then tD),
    # but never below the per-block byte floor where per-step overhead dominates.
    def steps(a, b):
        return B * (T // a) * (D // b)

    ti, di = t_divs.index(tT), d_divs.index(tD)
    while steps(tT, tD) < _MIN_GRID_STEPS:
        if ti + 1 < len(t_divs) and t_divs[ti + 1] * tD * itemsize >= _MIN_TILE_BYTES:
            ti += 1
            tT = t_divs[ti]
        elif di + 1 < len(d_divs) and tT * d_divs[di + 1] * itemsize >= _MIN_TILE_BYTES:
            di += 1
            tD = d_divs[di]
        else:
            break
    return tT, tD


def transpose_1_2(x: jax.Array) -> jax.Array:
    """Pallas equivalent of Transpose(shape=(1, 2)) on a rank-3 (B, T, D) tensor."""
    B, T, D = x.shape

    # Ragged / lane-hostile shapes: the pad+slice path adds a full extra HBM
    # read+write (~3x traffic for a pure-bandwidth op), so use XLA directly.
    # TODO(synk): in-kernel edge handling (masked stores on the last tile) would
    # let non-128-multiple shapes use the kernel path too.
    if T % _LANE != 0 or D % _LANE != 0:
        return jnp.swapaxes(x, 1, 2)

    itemsize = jnp.dtype(x.dtype).itemsize
    tile_budget, vmem_limit = _vmem_budgets()
    tT, tD = _choose_tiles(B, T, D, itemsize, tile_budget)

    # Grid: largest extent first so megacore sharding / pipelining stays busy.
    extents = (B, T // tT, D // tD)                 # logical order: (b, t, d)
    order = sorted(range(3), key=lambda i: -extents[i])
    grid = tuple(extents[i] for i in order)
    pb, pt, pd = (order.index(i) for i in range(3))

    in_spec = pl.BlockSpec((pl.Squeezed(), tT, tD),
                           lambda *g: (g[pb], g[pt], g[pd]))
    out_spec = pl.BlockSpec((pl.Squeezed(), tD, tT),
                            lambda *g: (g[pb], g[pd], g[pt]))

    cost = pl.CostEstimate(
        flops=0,
        transcendentals=0,
        bytes_accessed=2 * B * T * D * itemsize,    # read + write: pure HBM traffic
    )

    return pl.pallas_call(
        _transpose_kernel,
        out_shape=jax.ShapeDtypeStruct((B, D, T), x.dtype),
        grid_spec=pltpu.PrefetchScalarGridSpec(
            num_scalar_prefetch=0,
            grid=grid,
            in_specs=[in_spec],
            out_specs=out_spec,
        ),
        compiler_params=pltpu.CompilerParams(
            dimension_semantics=("parallel", "parallel", "parallel"),
            vmem_limit_bytes=vmem_limit,
        ),
        cost_estimate=cost,
    )(x)


class TransposePallas:
    """Mirror of the PyTorch Transpose module (no parameters)."""

    def __init__(self, shape):
        self.shape = tuple(shape)

    def __call__(self, x: jax.Array) -> jax.Array:
        d0, d1 = self.shape
        d0 %= x.ndim
        d1 %= x.ndim
        # Kernel path implemented for the conformer use-case: rank-3, swap axes 1 and 2.
        if x.ndim == 3 and sorted((d0, d1)) == [1, 2]:
            return transpose_1_2(x)
        # TODO(synk): general-rank / other-axis transposes fall back to plain JAX glue.
        return jnp.swapaxes(x, d0, d1)


if __name__ == "__main__":
    key = jax.random.PRNGKey(0)
    module = TransposePallas(shape=(1, 2))

    # 1) Kernel path: f32, 128-aligned (B, T, D) = (2, 256, 128).
    x1 = jax.random.normal(key, (2, 256, 128), dtype=jnp.float32)
    y1 = jax.block_until_ready(module(x1))
    assert y1.shape == (2, 128, 256), y1.shape
    assert jnp.array_equal(y1, jnp.swapaxes(x1, 1, 2)), "mismatch (kernel, f32)"

    # 2) Kernel path: bf16, 128-aligned (2, 128, 256).
    x2 = jax.random.normal(key, (2, 128, 256), dtype=jnp.float32).astype(jnp.bfloat16)
    y2 = jax.block_until_ready(module(x2))
    assert y2.shape == (2, 256, 128), y2.shape
    assert jnp.array_equal(y2, jnp.swapaxes(x2, 1, 2)), "mismatch (kernel, bf16)"

    # 3) Ragged shape: routed to the XLA fallback (no pad+slice traffic).
    x3 = jax.random.normal(key, (2, 200, 160), dtype=jnp.float32)
    y3 = jax.block_until_ready(module(x3))
    assert y3.shape == (2, 160, 200), y3.shape
    assert jnp.array_equal(y3, jnp.swapaxes(x3, 1, 2)), "mismatch (fallback ragged)"

    # 4) Small / lane-hostile shape: XLA fallback by design.
    x4 = jax.random.normal(key, (2, 8, 32), dtype=jnp.float32)
    y4 = jax.block_until_ready(module(x4))
    assert y4.shape == (2, 32, 8), y4.shape
    assert jnp.array_equal(y4, jnp.swapaxes(x4, 1, 2)), "mismatch (fallback small)"

    print("KERNEL_OK")
</pallas_src>

<mosaic_0001>
module attributes {stable_mosaic.version = 11 : i64} {
  func.func @_transpose_kernel(%arg0: i32, %arg1: i32, %arg2: i32, %arg3: memref<1x256x128xf32, #tpu.memory_space<vmem>>, %arg4: memref<1x128x256xf32, #tpu.memory_space<vmem>>) attributes {dimension_semantics = [#tpu.dimension_semantics<parallel>, #tpu.dimension_semantics<parallel>, #tpu.dimension_semantics<parallel>], iteration_bounds = array<i64: 2, 1, 1>, scalar_prefetch = 0 : i64, scratch_operands = 0 : i64, tpu.core_type = #tpu.core_type<tc>, window_params = [{transform_indices = @transform_0, window_bounds = array<i64: 1, 256, 128>}, {transform_indices = @transform_1, window_bounds = array<i64: 1, 128, 256>}]} {
    %c0 = arith.constant 0 : index
    %c0_0 = arith.constant 0 : index
    %c0_1 = arith.constant 0 : index
    %0 = vector.load %arg3[%c0, %c0_0, %c0_1] : memref<1x256x128xf32, #tpu.memory_space<vmem>>, vector<1x256x128xf32>
    %1 = vector.shape_cast %0 : vector<1x256x128xf32> to vector<256x128xf32>
    %2 = tpu.transpose %1, [1, 0] : vector<256x128xf32> -> vector<128x256xf32>
    %c0_2 = arith.constant 0 : index
    %c0_3 = arith.constant 0 : index
    %c0_4 = arith.constant 0 : index
    %3 = vector.load %arg4[%c0_2, %c0_3, %c0_4] : memref<1x128x256xf32, #tpu.memory_space<vmem>>, vector<1x128x256xf32>
    %4 = vector.shape_cast %3 : vector<1x128x256xf32> to vector<128x256xf32>
    %5 = vector.shape_cast %2 : vector<128x256xf32> to vector<1x128x256xf32>
    tpu.vector_store %arg4[%c0_2, %c0_3, %c0_4], %5 {strides = array<i32>} : memref<1x128x256xf32, #tpu.memory_space<vmem>>, vector<1x128x256xf32>,
    return
  }
  func.func @transform_0(%arg0: i32, %arg1: i32, %arg2: i32) -> (i32, i32, i32) {
    %c0_i32 = arith.constant 0 : i32
    return %arg0, %arg1, %arg2 : i32, i32, i32
  }
  func.func @transform_1(%arg0: i32, %arg1: i32, %arg2: i32) -> (i32, i32, i32) {
    %c0_i32 = arith.constant 0 : i32
    return %arg0, %arg2, %arg1 : i32, i32, i32
  }
}

</mosaic_0001>

<llo_original>
// kernel: tpu_custom_call.1
$region0: #{tpu_custom_call.1}
  #allocation0 [shape = 'u32[]', space=smem, size = 0x4, offset = 0x4, fixed_abs, tag = 'smem constant byte address 0x4 - core index']
  #allocation1 [shape = 'u32[144,128]{1,0:T(1,128)}', space=vmem, size = 0x12000, scoped, tag = 'internal scratch']
  %s0 = inlined_call_operand.hbm [shape: f32[2,256,128], index: 0, kind: input, shape index: {}]
  %s1 = inlined_call_operand.hbm [shape: f32[2,128,256], index: 1, kind: output, shape index: {}]
  %s2 = sld [smem:[#allocation0]]
  $region41: #{tpu_custom_call.1} parent=0
    _
  %s4 = ssub.s32 1, %s2
  %s5 = scalar_select 0, %s4, %s2
  $region1: #{tpu_custom_call.1} parent=0
    #allocation2 [shape = 'u8[262144]{0}', space=vmem, size = 0x40000, scoped, tag = 'input window, operand 0']
    #allocation3 [shape = 's32[2]{0}', space=sflag, size = 0x8, scoped, tag = 'scoped memory for tpu_custom_call.1']
    #allocation4 [shape = 's32[2]{0}', space=sflag, size = 0x8, scoped, tag = 'scoped memory for tpu_custom_call.1']
    #allocation5 [shape = 'u8[262144]{0}', space=vmem, size = 0x40000, scoped, tag = 'output window, operand 0']
    %6 = vsyncpa [#allocation3], 0
    %s7 = scalar_lea.sflag [#allocation3], 1
    %8 = vsyncpa %s7, 0
    %9 = vsyncpa [#allocation4], 0
    %s10 = scalar_lea.sflag [#allocation4], 1
    %11 = vsyncpa %s10, 0
    loop: start=0, step=1, limit=4
    $region2: #{tpu_custom_call.1} parent=1 // loop_pre_header
      _
    $region3: #{tpu_custom_call.1} parent=1 // loop_header
      %s13 = sphi 0, %s17
      %p14 = scmp.ge.s32.totalorder %s13, 4
      %s20 = sphi 0, %s39
      %s21 = sphi 0, %s35
      %s22 = sphi 0, %s31
      %s23 = sphi 0, %s20
      %s24 = sphi 0, %s21
      %s25 = sphi 0, %s22
      %s26 = sphi 0, %s23
      %s27 = sphi 0, %s24
      %s28 = sphi 0, %s25
      %s46 = sphi 0, %s48
      %s49 = sphi 0, %s46
      %s50 = sphi 0, %s49
      %s66 = sphi 0, %s50
      %s76 = sphi 0, %s78
      %s79 = sphi 0, %s76
      %s80 = sphi 0, %s79
      %s96 = sphi 0, %s80
    $region4: #{tpu_custom_call.1} parent=1 // loop_header_branch
      %16 = sbr.rel (%p14) target = $region8
    $region5: #{tpu_custom_call.1} parent=1 // loop_body
      %s18 = ssub.s32 %s13, 1
      %s19 = ssub.s32 %s13, 2
      %s29 = sadd.s32 1, %s22
      %p30 = scmp.ge.s32.totalorder %s29, 1
      %s31 = scalar_select %p30, 0, %s29
      %s32 = sadd.s32 1, %s21
      %s33 = scalar_select %p30, %s32, %s21
      %p34 = scmp.ge.s32.totalorder %s33, 1
      %s35 = scalar_select %p34, 0, %s33
      %s36 = sadd.s32 1, %s20
      %s37 = scalar_select %p34, %s36, %s20
      %p38 = scmp.ge.s32.totalorder %s37, 2
      %s39 = scalar_select %p38, 0, %s37
      %s40 = ssub.s32 %s20, %s39
      %s41 = ssub.s32 %s21, %s35
      %s42 = sor.u32 %s40, %s41
      %s43 = ssub.s32 %s22, %s31
      %s44 = sor.u32 %s42, %s43
      %p45 = scmp.eq.s32.totalorder %s44, 0
      %s47 = sadd.s32 %s46, 1
      %s48 = scalar_select %p45, %s46, %s47
      %p51 = pneg %p45
      %p52 = scmp.eq.s32.totalorder %s13, 1
      %p53 = por %p51, %p52
      %p54 = scmp.ne.s32.totalorder %s46, %s49
      %p55 = scmp.eq.s32.totalorder %s13, 0
      %p56 = por %p54, %p55
      %p57 = scmp.ne.s32.totalorder %s46, %s49
      %p58 = scmp.eq.s32.totalorder %s18, 1
      %p59 = por %p57, %p58
      %p60 = scmp.ne.s32.totalorder %s49, %s50
      %p61 = scmp.eq.s32.totalorder %s18, 0
      %p62 = por %p60, %p61
      %p63 = scmp.ne.s32.totalorder %s49, %s50
      %p64 = scmp.eq.s32.totalorder %s19, 1
      %p65 = por %p63, %p64
      %p67 = scmp.ne.s32.totalorder %s50, %s66
      %p68 = scmp.eq.s32.totalorder %s19, 0
      %p69 = por %p67, %p68
      %s70 = ssub.s32 %s20, %s39
      %s71 = ssub.s32 %s22, %s31
      %s72 = sor.u32 %s70, %s71
      %s73 = ssub.s32 %s21, %s35
      %s74 = sor.u32 %s72, %s73
      %p75 = scmp.eq.s32.totalorder %s74, 0
      %s77 = sadd.s32 %s76, 1
      %s78 = scalar_select %p75, %s76, %s77
      %p81 = pneg %p75
      %p82 = scmp.eq.s32.totalorder %s13, 1
      %p83 = por %p81, %p82
      %p84 = scmp.ne.s32.totalorder %s76, %s79
      %p85 = scmp.eq.s32.totalorder %s13, 0
      %p86 = por %p84, %p85
      %p87 = scmp.ne.s32.totalorder %s76, %s79
      %p88 = scmp.eq.s32.totalorder %s18, 1
      %p89 = por %p87, %p88
      %p90 = scmp.ne.s32.totalorder %s79, %s80
      %p91 = scmp.eq.s32.totalorder %s18, 0
      %p92 = por %p90, %p91
      %p93 = scmp.ne.s32.totalorder %s79, %s80
      %p94 = scmp.eq.s32.totalorder %s19, 1
      %p95 = por %p93, %p94
      %p97 = scmp.ne.s32.totalorder %s80, %s96
      %p98 = scmp.eq.s32.totalorder %s19, 0
      %p99 = por %p97, %p98
      %p100 = scmp.le.s32.totalorder 1, %s13
      %p101 = scmp.lt.s32.totalorder %s13, 3
      %p102 = pnand %p100, %p101
      %p103 = pneg %p102
      // Predicated region
      $region9: #{tpu_custom_call.1} parent=5 // pred_check
        _
      $region10: #{tpu_custom_call.1} parent=5 // pred_check_branch
        %105 = sbr.rel (%p102) target = $region12
      $region11: #{tpu_custom_call.1} parent=5 // pred_region
        %s106 = ssub.s32 %s13, 1
      $region12: #{tpu_custom_call.1} parent=5 // pred_fallthru
        _
      %p107 = scmp.lt.s32.totalorder %s13, 2
      // Predicated region
      $region13: #{tpu_custom_call.1} parent=5 // pred_check
        %p108 = pneg %p107
      $region14: #{tpu_custom_call.1} parent=5 // pred_check_branch
        %110 = sbr.rel (%p108) target = $region16
      $region15: #{tpu_custom_call.1} parent=5 // pred_region
        // Predicated region
        $region17: #{tpu_custom_call.1} parent=15 // pred_check
          %p111 = pneg %p56
        $region18: #{tpu_custom_call.1} parent=15 // pred_check_branch
          %113 = sbr.rel (%p111) target = $region20
        $region19: #{tpu_custom_call.1} parent=15 // pred_region
          %s114 = sand.u32 %s46, 1
          %s115 = scalar_lea.sflag [#allocation3], %s114
          %s116 = sand.u32 %s46, 1
          %s117 = smul.addr %s116, 256
          %s118 = scalar_lea.vmem [#allocation2], %s117
          %s119 = smul.u32 32, %s21
          %s121 = ssub.s32 4096, 4096
          %122 = vsyncadd %s115, %s121
          %s123 = sadd.s32 %s22, %s119
          %s124 = smul.addr %s20, 32
          %s125 = sadd.s32 %s123, %s124
          %s126 = smul.addr %s125, 128
          %s127 = scalar_lea.hbm %s0, %s126
          %s128 = sshll.u32 %s118, 4
          %s129 = int_to_ptr.vmem [resolvable:$true] %s128
          %134 = dma.hbm_to_vmem [thread:$0]  %s127, 4096, %s129, %s115, 128, 128, 8
        $region20: #{tpu_custom_call.1} parent=15 // pred_fallthru
          _
      $region16: #{tpu_custom_call.1} parent=5 // pred_fallthru
        _
      %p135 = scmp.le.s32.totalorder 1, %s13
      %p136 = scmp.lt.s32.totalorder %s13, 3
      %p137 = pnand %p135, %p136
      %p138 = pneg %p137
      // Predicated region
      $region21: #{tpu_custom_call.1} parent=5 // pred_check
        _
      $region22: #{tpu_custom_call.1} parent=5 // pred_check_branch
        %140 = sbr.rel (%p137) target = $region24
      $region23: #{tpu_custom_call.1} parent=5 // pred_region
        %s141 = ssub.s32 %s13, 1
        %s142 = sand.u32 %s49, 1
        %s143 = scalar_lea.sflag [#allocation3], %s142
        %s144 = sand.u32 %s49, 1
        %s145 = smul.addr %s144, 256
        %s146 = scalar_lea.vmem [#allocation2], %s145
        // Predicated region
        $region25: #{tpu_custom_call.1} parent=23 // pred_check
          %p147 = pneg %p62
        $region26: #{tpu_custom_call.1} parent=23 // pred_check_branch
          %149 = sbr.rel (%p147) target = $region28
        $region27: #{tpu_custom_call.1} parent=23 // pred_region
          %150 = dma.done %s143, 4096
        $region28: #{tpu_custom_call.1} parent=23 // pred_fallthru
          _
        %s151 = sand.u32 %s49, 1
        %s152 = scalar_lea.sflag [#allocation3], %s151
        %s153 = sand.u32 %s49, 1
        %s154 = smul.addr %s153, 256
        %s155 = scalar_lea.vmem [#allocation2], %s154
        %p156 = pneg %p62
        %p157 = pneg %p59
        %p158 = pneg %p92
        %p159 = pneg %p89
        %s160 = sand.u32 %s79, 1
        %s161 = scalar_lea.sflag [#allocation4], %s160
        %s162 = sand.u32 %s79, 1
        %s163 = smul.addr %s162, 256
        %s164 = scalar_lea.vmem [#allocation5], %s163
        %s165 = smul.u32 32, %s24
        %s166 = smul.u32 16, %s25
        %s167 = smul.u32 2, %s24
        %v168 = vld [vmem:[%s146] sm:$0xff]
        %v169 = vld [vmem:[%s146 + $0x8] sm:$0xff]
        %v170 = vld [vmem:[%s146 + $0x10] sm:$0xff]
        %v171 = vld [vmem:[%s146 + $0x18] sm:$0xff]
        %v172 = vld [vmem:[%s146 + $0x20] sm:$0xff]
        %v173 = vld [vmem:[%s146 + $0x28] sm:$0xff]
        %v174 = vld [vmem:[%s146 + $0x30] sm:$0xff]
        %v175 = vld [vmem:[%s146 + $0x38] sm:$0xff]
        %v176 = vld [vmem:[%s146 + $0x40] sm:$0xff]
        %v177 = vld [vmem:[%s146 + $0x48] sm:$0xff]
        %v178 = vld [vmem:[%s146 + $0x50] sm:$0xff]
        %v179 = vld [vmem:[%s146 + $0x58] sm:$0xff]
        %v180 = vld [vmem:[%s146 + $0x60] sm:$0xff]
        %v181 = vld [vmem:[%s146 + $0x68] sm:$0xff]
        %v182 = vld [vmem:[%s146 + $0x70] sm:$0xff]
        %v183 = vld [vmem:[%s146 + $0x78] sm:$0xff]
        %v184 = vld [vmem:[%s146 + $0x80] sm:$0xff]
        %v185 = vld [vmem:[%s146 + $0x88] sm:$0xff]
        %v186 = vld [vmem:[%s146 + $0x90] sm:$0xff]
        %v187 = vld [vmem:[%s146 + $0x98] sm:$0xff]
        %v188 = vld [vmem:[%s146 + $0xa0] sm:$0xff]
        %v189 = vld [vmem:[%s146 + $0xa8] sm:$0xff]
        %v190 = vld [vmem:[%s146 + $0xb0] sm:$0xff]
        %v191 = vld [vmem:[%s146 + $0xb8] sm:$0xff]
        %v192 = vld [vmem:[%s146 + $0xc0] sm:$0xff]
        %v193 = vld [vmem:[%s146 + $0xc8] sm:$0xff]
        %v194 = vld [vmem:[%s146 + $0xd0] sm:$0xff]
        %v195 = vld [vmem:[%s146 + $0xd8] sm:$0xff]
        %v196 = vld [vmem:[%s146 + $0xe0] sm:$0xff]
        %v197 = vld [vmem:[%s146 + $0xe8] sm:$0xff]
        %v198 = vld [vmem:[%s146 + $0xf0] sm:$0xff]
        %v199 = vld [vmem:[%s146 + $0xf8] sm:$0xff]
        %200 = vxpose.xlu0.b32.start [1/16] %v168, 128
        %201 = vxpose.xlu0.b32.cont [2/16] %v169, 128
        %202 = vxpose.xlu0.b32.cont [3/16] %v170, 128
        %203 = vxpose.xlu0.b32.cont [4/16] %v171, 128
        %204 = vxpose.xlu0.b32.cont [5/16] %v172, 128
        %205 = vxpose.xlu0.b32.cont [6/16] %v173, 128
        %206 = vxpose.xlu0.b32.cont [7/16] %v174, 128
        %207 = vxpose.xlu0.b32.cont [8/16] %v175, 128
        %208 = vxpose.xlu0.b32.cont [9/16] %v176, 128
        %209 = vxpose.xlu0.b32.cont [10/16] %v177, 128
        %210 = vxpose.xlu0.b32.cont [11/16] %v178, 128
        %211 = vxpose.xlu0.b32.cont [12/16] %v179, 128
        %212 = vxpose.xlu0.b32.cont [13/16] %v180, 128
        %213 = vxpose.xlu0.b32.cont [14/16] %v181, 128
        %214 = vxpose.xlu0.b32.cont [15/16] %v182, 128
        %215 = vxpose.xlu0.b32.end [16/16] %v183, 128
        %v216 = vpop.trf.xlu0
        %v217 = vpop.trf.xlu0
        %v218 = vpop.trf.xlu0
        %v219 = vpop.trf.xlu0
        %v220 = vpop.trf.xlu0
        %v221 = vpop.trf.xlu0
        %v222 = vpop.trf.xlu0
        %v223 = vpop.trf.xlu0
        %v224 = vpop.trf.xlu0
        %v225 = vpop.trf.xlu0
        %v226 = vpop.trf.xlu0
        %v227 = vpop.trf.xlu0
        %v228 = vpop.trf.xlu0
        %v229 = vpop.trf.xlu0
        %v230 = vpop.trf.xlu0
        %v231 = vpop.trf.xlu0
        %232 = vxpose.xlu0.b32.start [1/16] %v184, 128
        %233 = vxpose.xlu0.b32.cont [2/16] %v185, 128
        %234 = vxpose.xlu0.b32.cont [3/16] %v186, 128
        %235 = vxpose.xlu0.b32.cont [4/16] %v187, 128
        %236 = vxpose.xlu0.b32.cont [5/16] %v188, 128
        %237 = vxpose.xlu0.b32.cont [6/16] %v189, 128
        %238 = vxpose.xlu0.b32.cont [7/16] %v190, 128
        %239 = vxpose.xlu0.b32.cont [8/16] %v191, 128
        %240 = vxpose.xlu0.b32.cont [9/16] %v192, 128
        %241 = vxpose.xlu0.b32.cont [10/16] %v193, 128
        %242 = vxpose.xlu0.b32.cont [11/16] %v194, 128
        %243 = vxpose.xlu0.b32.cont [12/16] %v195, 128
        %244 = vxpose.xlu0.b32.cont [13/16] %v196, 128
        %245 = vxpose.xlu0.b32.cont [14/16] %v197, 128
        %246 = vxpose.xlu0.b32.cont [15/16] %v198, 128
        %247 = vxpose.xlu0.b32.end [16/16] %v199, 128
        %v248 = vpop.trf.xlu0
        %v249 = vpop.trf.xlu0
        %v250 = vpop.trf.xlu0
        %v251 = vpop.trf.xlu0
        %v252 = vpop.trf.xlu0
        %v253 = vpop.trf.xlu0
        %v254 = vpop.trf.xlu0
        %v255 = vpop.trf.xlu0
        %v256 = vpop.trf.xlu0
        %v257 = vpop.trf.xlu0
        %v258 = vpop.trf.xlu0
        %v259 = vpop.trf.xlu0
        %v260 = vpop.trf.xlu0
        %v261 = vpop.trf.xlu0
        %v262 = vpop.trf.xlu0
        %v263 = vpop.trf.xlu0
        %264 = vst [vmem:[%s164] sm:$0xff] %v216
        %265 = vst [vmem:[%s164 + $0x8] sm:$0xff] %v248
        %266 = vst [vmem:[%s164 + $0x10] sm:$0xff] %v217
        %267 = vst [vmem:[%s164 + $0x18] sm:$0xff] %v249
        %268 = vst [vmem:[%s164 + $0x20] sm:$0xff] %v218
        %269 = vst [vmem:[%s164 + $0x28] sm:$0xff] %v250
        %270 = vst [vmem:[%s164 + $0x30] sm:$0xff] %v219
        %271 = vst [vmem:[%s164 + $0x38] sm:$0xff] %v251
        %272 = vst [vmem:[%s164 + $0x40] sm:$0xff] %v220
        %273 = vst [vmem:[%s164 + $0x48] sm:$0xff] %v252
        %274 = vst [vmem:[%s164 + $0x50] sm:$0xff] %v221
        %275 = vst [vmem:[%s164 + $0x58] sm:$0xff] %v253
        %276 = vst [vmem:[%s164 + $0x60] sm:$0xff] %v222
        %277 = vst [vmem:[%s164 + $0x68] sm:$0xff] %v254
        %278 = vst [vmem:[%s164 + $0x70] sm:$0xff] %v223
        %279 = vst [vmem:[%s164 + $0x78] sm:$0xff] %v255
        %280 = vst [vmem:[%s164 + $0x80] sm:$0xff] %v224
        %281 = vst [vmem:[%s164 + $0x88] sm:$0xff] %v256
        %282 = vst [vmem:[%s164 + $0x90] sm:$0xff] %v225
        %283 = vst [vmem:[%s164 + $0x98] sm:$0xff] %v257
        %284 = vst [vmem:[%s164 + $0xa0] sm:$0xff] %v226
        %285 = vst [vmem:[%s164 + $0xa8] sm:$0xff] %v258
        %286 = vst [vmem:[%s164 + $0xb0] sm:$0xff] %v227
        %287 = vst [vmem:[%s164 + $0xb8] sm:$0xff] %v259
        %288 = vst [vmem:[%s164 + $0xc0] sm:$0xff] %v228
        %289 = vst [vmem:[%s164 + $0xc8] sm:$0xff] %v260
        %290 = vst [vmem:[%s164 + $0xd0] sm:$0xff] %v229
        %291 = vst [vmem:[%s164 + $0xd8] sm:$0xff] %v261
        %292 = vst [vmem:[%s164 + $0xe0] sm:$0xff] %v230
        %293 = vst [vmem:[%s164 + $0xe8] sm:$0xff] %v262
        %294 = vst [vmem:[%s164 + $0xf0] sm:$0xff] %v231
        %295 = vst [vmem:[%s164 + $0xf8] sm:$0xff] %v263
        %s296 = sand.u32 %s79, 1
        %s297 = scalar_lea.sflag [#allocation4], %s296
        %s298 = sand.u32 %s79, 1
        %s299 = smul.addr %s298, 256
        %s300 = scalar_lea.vmem [#allocation5], %s299
        // Predicated region
        $region29: #{tpu_custom_call.1} parent=23 // pred_check
          %p301 = pneg %p89
        $region30: #{tpu_custom_call.1} parent=23 // pred_check_branch
          %303 = sbr.rel (%p301) target = $region32
        $region31: #{tpu_custom_call.1} parent=23 // pred_region
          %s304 = smul.u32 16, %s25
          %s305 = smul.u32 2, %s24
          %s307 = ssub.s32 4096, 4096
          %308 = vsyncadd %s297, %s307
          %s309 = smul.addr %s304, 2
          %s310 = sadd.s32 %s305, %s309
          %s311 = smul.addr %s23, 32
          %s312 = sadd.s32 %s310, %s311
          %s313 = smul.addr %s312, 128
          %s314 = scalar_lea.hbm %s1, %s313
          %s315 = sshll.u32 %s300, 4
          %s316 = int_to_ptr.vmem [resolvable:$true] %s315
          %321 = dma.vmem_to_hbm [thread:$0]  %s316, 4096, %s314, %s297, 256, 256, 16
        $region32: #{tpu_custom_call.1} parent=23 // pred_fallthru
          _
      $region24: #{tpu_custom_call.1} parent=5 // pred_fallthru
        _
      %p322 = scmp.le.s32.totalorder 2, %s13
      // Predicated region
      $region33: #{tpu_custom_call.1} parent=5 // pred_check
        %p323 = pneg %p322
      $region34: #{tpu_custom_call.1} parent=5 // pred_check_branch
        %325 = sbr.rel (%p323) target = $region36
      $region35: #{tpu_custom_call.1} parent=5 // pred_region
        %s326 = ssub.s32 %s13, 2
        // Predicated region
        $region37: #{tpu_custom_call.1} parent=35 // pred_check
          %p327 = pneg %p95
        $region38: #{tpu_custom_call.1} parent=35 // pred_check_branch
          %329 = sbr.rel (%p327) target = $region40
        $region39: #{tpu_custom_call.1} parent=35 // pred_region
          %s330 = sand.u32 %s80, 1
          %s331 = scalar_lea.sflag [#allocation4], %s330
          %s332 = sand.u32 %s80, 1
          %s333 = smul.addr %s332, 256
          %s334 = scalar_lea.vmem [#allocation5], %s333
          %335 = dma.done %s331, 4096
        $region40: #{tpu_custom_call.1} parent=35 // pred_fallthru
          _
      $region36: #{tpu_custom_call.1} parent=5 // pred_fallthru
        _
    $region6: #{tpu_custom_call.1} parent=1 // loop_footer
      %s17 = sadd.s32 1, %s13
    $region7: #{tpu_custom_call.1} parent=1 // loop_footer_branch
      %12 = sbr.rel target = $region3
    $region8: #{tpu_custom_call.1} parent=1 // loop_exit
      _
    %336 = vsyncpa [#allocation3], 1
    %s337 = scalar_lea.sflag [#allocation3], 1
    %338 = vsyncpa %s337, 1
    %339 = vsyncpa [#allocation4], 1
    %s340 = scalar_lea.sflag [#allocation4], 1
    %341 = vsyncpa %s340, 1

</llo_original>
